<compile_context>
chip_gen: v7x
topology: tpu7x:2x2x1
jax: 0.10.0
libtpu: 0.0.40
codegen_flags: <defaults>
</compile_context>

<pallas_src>
import jax
import jax.numpy as jnp
from jax.experimental import pallas as pl
from jax.experimental.pallas import tpu as pltpu

_LANE = 128
_MIB = 1024 * 1024


def _round_up(x, m):
    return ((x + m - 1) // m) * m


def _vmem_capacity_bytes():
    try:
        return int(pltpu.get_tpu_info().vmem_capacity_bytes)
    except Exception:
        return 64 * _MIB  # conservative: v7x per-TensorCore capacity


def _footprint_bytes(tb, th, dp, bytes_in, bytes_out, single_buffer_weights):
    nbw = 1 if single_buffer_weights else 2
    return (2 * tb * dp * bytes_in            # x tile, double-buffered
            + 2 * tb * dp * bytes_out         # out tile, double-buffered
            + 2 * nbw * dp * th * bytes_in    # W1 + W2 blocks
            + nbw * th * 4 + dp * 4           # b1, b2 (f32)
            + tb * dp * 4                     # f32 accumulator scratch
            + tb * th * 4)                    # f32 h intermediate


def _select_tiles(batch, dp, bytes_in, bytes_out, sub, block_b, budget):
    """Pick (TB, TH, kh) so the per-core VMEM footprint fits `budget`.

    TH must divide Dp exactly (and stay a multiple of 128) so no hidden-axis
    block ever reads out of bounds."""
    n128 = dp // _LANE
    kh_candidates = [k for k in range(1, n128 + 1) if n128 % k == 0]
    tb = _round_up(min(block_b, _round_up(batch, sub)), sub)
    while True:
        for kh in kh_candidates:
            th = dp // kh
            if _footprint_bytes(tb, th, dp, bytes_in, bytes_out, kh == 1) <= budget:
                return tb, th, kh
        if tb <= sub:
            return sub, _LANE, n128   # smallest config; let the compiler try
        tb = max(sub, _round_up(tb // 2, sub))


def _mlp_kernel(x_ref, w1_ref, b1_ref, w2_ref, b2_ref, o_ref, acc_ref):
    k = pl.program_id(1)

    @pl.when(k == 0)
    def _():
        acc_ref[...] = jnp.zeros_like(acc_ref)

    # net1 slice: h_k = relu(x @ W1[:, k*TH:(k+1)*TH] + b1[k*TH:(k+1)*TH]), f32.
    h = jnp.dot(x_ref[...], w1_ref[...], preferred_element_type=jnp.float32)
    h = jnp.maximum(h + b1_ref[...], 0.0)

    # net2 partial product over this hidden slice, accumulated in f32 VMEM.
    # Cast h back to the MXU compute dtype (bf16 path) before the second matmul.
    acc_ref[...] += jnp.dot(h.astype(w2_ref.dtype), w2_ref[...],
                            preferred_element_type=jnp.float32)

    @pl.when(k == pl.num_programs(1) - 1)
    def _():
        o_ref[...] = (acc_ref[...] + b2_ref[...]).astype(o_ref.dtype)


def prepare_mlp_params(w1, b1, w2, b2, *, compute_dtype=jnp.bfloat16):
    """One-time parameter prep: pad the feature dim to a multiple of 128 (lane
    dense) and cast weights to the MXU compute dtype.  Call once, reuse across
    forward steps — do NOT re-pad per call."""
    d = w1.shape[0]
    cdt = jnp.dtype(compute_dtype)
    dp = _round_up(d, _LANE)
    if dp == d and jnp.dtype(w1.dtype) == cdt:
        w1p, w2p = w1, w2
    else:
        w1p = jnp.zeros((dp, dp), cdt).at[:d, :d].set(w1.astype(cdt))
        w2p = jnp.zeros((dp, dp), cdt).at[:d, :d].set(w2.astype(cdt))
    b1p = jnp.zeros((1, dp), jnp.float32).at[0, :d].set(b1.astype(jnp.float32))
    b2p = jnp.zeros((1, dp), jnp.float32).at[0, :d].set(b2.astype(jnp.float32))
    return {"w1": w1p, "b1": b1p, "w2": w2p, "b2": b2p,
            "d": d, "dp": dp, "compute_dtype": cdt}


def mlp_forward(x, params, *, block_b=None, out_dtype=None):
    """Fused net1 -> ReLU -> net2 forward.  x: [B, D]; params from prepare_mlp_params."""
    batch, d = x.shape
    assert d == params["d"], "x feature dim does not match prepared params"
    dp, cdt = params["dp"], params["compute_dtype"]
    odt = jnp.dtype(out_dtype) if out_dtype is not None else jnp.dtype(x.dtype)

    # Sublane multiple for the batch tile: 8 (f32), 16 (bf16), 32 (int8/fp8).
    sub = max(8, 32 // cdt.itemsize, 32 // odt.itemsize)

    cap = _vmem_capacity_bytes()
    budget = max(cap - 12 * _MIB, 32 * _MIB)       # headroom: mosaic scratch, sems
    if block_b is None:
        block_b = 512 if cap >= 96 * _MIB else 256  # v5e/v6e (128 MiB) vs v7x (64 MiB)

    tb, th, kh = _select_tiles(batch, dp, cdt.itemsize, odt.itemsize, sub,
                               block_b, budget)
    single = (kh == 1)  # weights fully VMEM-resident -> constant index maps

    # Only the feature axis needs zero padding (exact: padded hidden columns stay
    # relu(0)=0, padded output columns stay 0); the batch axis relies on Pallas
    # partial-tile masking, so no (Bp, Dp) copy of x is written to HBM.
    if dp == d and jnp.dtype(x.dtype) == cdt:
        xp = x
    else:
        xp = jnp.zeros((batch, dp), cdt).at[:, :d].set(x.astype(cdt))

    footprint = _footprint_bytes(tb, th, dp, cdt.itemsize, odt.itemsize, single)
    vmem_limit = int(min(budget, max(32 * _MIB,
                                     footprint + footprint // 4 + 2 * _MIB)))

    cost = pl.CostEstimate(
        flops=4 * batch * dp * dp,                               # two matmuls
        transcendentals=0,
        bytes_accessed=(2 * dp * dp + batch * dp) * cdt.itemsize  # weights + x
        + batch * dp * odt.itemsize                               # out
        + 2 * dp * 4,                                             # biases
    )

    def _spec(shape, index_map, single_buffer):
        if single_buffer:
            try:
                return pl.BlockSpec(shape, index_map, pipeline_mode=pl.Buffered(1))
            except TypeError:  # jax without pipeline_mode on BlockSpec
                pass
        return pl.BlockSpec(shape, index_map)

    # TODO(synk): for latency-bound small-batch calls at large D, start the W1/W2
    # HBM->VMEM DMA in a prior pallas_call and hand the semaphore in (cross-call
    # prefetch) instead of eating the weight DMA before grid step 0.
    def _build(use_buffered):
        in_specs = [
            pl.BlockSpec((tb, dp), lambda i, k: (i, 0)),                    # x
            _spec((dp, th), lambda i, k: (0, k), use_buffered and single),  # W1
            _spec((1, th), lambda i, k: (0, k), use_buffered and single),   # b1
            _spec((th, dp), lambda i, k: (k, 0), use_buffered and single),  # W2
            _spec((1, dp), lambda i, k: (0, 0), use_buffered),              # b2
        ]
        return pl.pallas_call(
            _mlp_kernel,
            out_shape=jax.ShapeDtypeStruct((batch, dp), odt),
            grid_spec=pltpu.PrefetchScalarGridSpec(
                num_scalar_prefetch=0,
                grid=(pl.cdiv(batch, tb), kh),   # reduction (hidden) axis last
                in_specs=in_specs,
                out_specs=pl.BlockSpec((tb, dp), lambda i, k: (i, 0)),
                scratch_shapes=[pltpu.VMEM((tb, dp), jnp.float32)],
            ),
            compiler_params=pltpu.CompilerParams(
                dimension_semantics=("parallel", "arbitrary"),
                vmem_limit_bytes=vmem_limit,
            ),
            cost_estimate=cost,
        )

    args = (xp, params["w1"], params["b1"], params["w2"], params["b2"])
    try:
        out_p = _build(True)(*args)
    except Exception:
        # Fallback if Buffered(1) single-buffering isn't supported by this jax
        # version: identical kernel, default double-buffering on resident operands.
        out_p = _build(False)(*args)

    return out_p[:, :d] if dp != d else out_p


def init_mlp_params(key, d_hid, dtype=jnp.float32):
    """Deterministic init mimicking torch.nn.Linear default:
    U(-1/sqrt(fan_in), 1/sqrt(fan_in)) for weights and biases.  Weights are built
    as [in, out] so the kernel computes x @ W (== x @ weight.T in torch)."""
    k1, k2, k3, k4 = jax.random.split(key, 4)
    bound = 1.0 / (d_hid ** 0.5)
    w1 = jax.random.uniform(k1, (d_hid, d_hid), dtype, -bound, bound)
    b1 = jax.random.uniform(k2, (d_hid,), dtype, -bound, bound)
    w2 = jax.random.uniform(k3, (d_hid, d_hid), dtype, -bound, bound)
    b2 = jax.random.uniform(k4, (d_hid,), dtype, -bound, bound)
    return w1, b1, w2, b2


if __name__ == "__main__":
    d_hid = 16   # matches the PyTorch spec
    batch = 20   # not a sublane multiple: exercises partial-tile masking

    key = jax.random.PRNGKey(0)
    kx, kp = jax.random.split(key)
    x = jax.random.normal(kx, (batch, d_hid), dtype=jnp.float32)
    w1, b1, w2, b2 = init_mlp_params(kp, d_hid)

    # Pure-JAX reference (identical math to the PyTorch module's forward).
    ref = jnp.maximum(x @ w1 + b1, 0.0) @ w2 + b2

    # Exact f32 path (same numerics as the torch module).
    p32 = prepare_mlp_params(w1, b1, w2, b2, compute_dtype=jnp.float32)
    out32 = jax.block_until_ready(mlp_forward(x, p32))
    assert out32.shape == (batch, d_hid)
    assert jnp.allclose(out32, ref, atol=1e-5, rtol=1e-5)

    # Default bf16 MXU path (f32 accumulation / bias / ReLU): looser tolerance.
    pbf = prepare_mlp_params(w1, b1, w2, b2)
    outbf = jax.block_until_ready(mlp_forward(x, pbf))
    assert outbf.shape == (batch, d_hid)
    assert jnp.allclose(outbf, ref, atol=5e-2, rtol=5e-2)

    print("KERNEL_OK")
</pallas_src>

<mosaic_0001>
module attributes {stable_mosaic.version = 11 : i64} {
  func.func @_mlp_kernel(%arg0: i32, %arg1: i32, %arg2: memref<24x128xf32, #tpu.memory_space<vmem>>, %arg3: memref<128x128xf32, #tpu.memory_space<vmem>>, %arg4: memref<1x128xf32, #tpu.memory_space<vmem>>, %arg5: memref<128x128xf32, #tpu.memory_space<vmem>>, %arg6: memref<1x128xf32, #tpu.memory_space<vmem>>, %arg7: memref<24x128xf32, #tpu.memory_space<vmem>>, %arg8: memref<24x128xf32, #tpu.memory_space<vmem>>) attributes {dimension_semantics = [#tpu.dimension_semantics<parallel>, #tpu.dimension_semantics<arbitrary>], iteration_bounds = array<i64: 1, 1>, scalar_prefetch = 0 : i64, scratch_operands = 1 : i64, tpu.core_type = #tpu.core_type<tc>, window_params = [{transform_indices = @transform_0, window_bounds = array<i64: 24, 128>}, {pipeline_mode = #tpu.pipeline_mode<synchronous>, transform_indices = @transform_1, window_bounds = array<i64: 128, 128>}, {pipeline_mode = #tpu.pipeline_mode<synchronous>, transform_indices = @transform_2, window_bounds = array<i64: 1, 128>}, {pipeline_mode = #tpu.pipeline_mode<synchronous>, transform_indices = @transform_3, window_bounds = array<i64: 128, 128>}, {pipeline_mode = #tpu.pipeline_mode<synchronous>, transform_indices = @transform_4, window_bounds = array<i64: 1, 128>}, {transform_indices = @transform_5, window_bounds = array<i64: 24, 128>}]} {
    %c0_i32 = arith.constant 0 : i32
    %0 = arith.cmpi eq, %arg1, %c0_i32 : i32
    %1 = arith.extui %0 : i1 to i32
    %c0_i32_0 = arith.constant 0 : i32
    %2 = arith.cmpi ne, %1, %c0_i32_0 : i32
    scf.if %2 {
      %cst_16 = arith.constant 0.000000e+00 : f32
      %19 = vector.broadcast %cst_16 : f32 to vector<24x128xf32>
      %c0_17 = arith.constant 0 : index
      %c0_18 = arith.constant 0 : index
      %20 = vector.load %arg8[%c0_17, %c0_18] : memref<24x128xf32, #tpu.memory_space<vmem>>, vector<24x128xf32>
      tpu.vector_store %arg8[%c0_17, %c0_18], %19 {strides = array<i32>} : memref<24x128xf32, #tpu.memory_space<vmem>>, vector<24x128xf32>,
    } else {
    }
    %c0 = arith.constant 0 : index
    %c0_1 = arith.constant 0 : index
    %3 = vector.load %arg2[%c0, %c0_1] : memref<24x128xf32, #tpu.memory_space<vmem>>, vector<24x128xf32>
    %c0_2 = arith.constant 0 : index
    %c0_3 = arith.constant 0 : index
    %4 = vector.load %arg3[%c0_2, %c0_3] : memref<128x128xf32, #tpu.memory_space<vmem>>, vector<128x128xf32>
    %cst = arith.constant dense<0.000000e+00> : vector<24x128xf32>
    %5 = tpu.matmul %3, %4, %cst {dimension_numbers = #tpu.dot_dimension_numbers<[1], [0], [0], [1], [0, 0, 1, 1], [], []>} : vector<24x128xf32>, vector<128x128xf32>, vector<24x128xf32> -> vector<24x128xf32>
    %c0_4 = arith.constant 0 : index
    %c0_5 = arith.constant 0 : index
    %6 = vector.load %arg4[%c0_4, %c0_5] : memref<1x128xf32, #tpu.memory_space<vmem>>, vector<1x128xf32>
    %7 = vector.broadcast %6 : vector<1x128xf32> to vector<24x128xf32>
    %8 = arith.addf %5, %7 : vector<24x128xf32>
    %cst_6 = arith.constant 0.000000e+00 : f32
    %9 = vector.broadcast %cst_6 : f32 to vector<24x128xf32>
    %10 = arith.maximumf %8, %9 : vector<24x128xf32>
    %c0_7 = arith.constant 0 : index
    %c0_8 = arith.constant 0 : index
    %11 = vector.load %arg8[%c0_7, %c0_8] : memref<24x128xf32, #tpu.memory_space<vmem>>, vector<24x128xf32>
    %c0_9 = arith.constant 0 : index
    %c0_10 = arith.constant 0 : index
    %12 = vector.load %arg5[%c0_9, %c0_10] : memref<128x128xf32, #tpu.memory_space<vmem>>, vector<128x128xf32>
    %cst_11 = arith.constant dense<0.000000e+00> : vector<24x128xf32>
    %13 = tpu.matmul %10, %12, %cst_11 {dimension_numbers = #tpu.dot_dimension_numbers<[1], [0], [0], [1], [0, 0, 1, 1], [], []>} : vector<24x128xf32>, vector<128x128xf32>, vector<24x128xf32> -> vector<24x128xf32>
    %14 = arith.addf %11, %13 : vector<24x128xf32>
    %c0_12 = arith.constant 0 : index
    %c0_13 = arith.constant 0 : index
    %15 = vector.load %arg8[%c0_12, %c0_13] : memref<24x128xf32, #tpu.memory_space<vmem>>, vector<24x128xf32>
    tpu.vector_store %arg8[%c0_12, %c0_13], %14 {strides = array<i32>} : memref<24x128xf32, #tpu.memory_space<vmem>>, vector<24x128xf32>,
    %c0_i32_14 = arith.constant 0 : i32
    %16 = arith.cmpi eq, %arg1, %c0_i32_14 : i32
    %17 = arith.extui %16 : i1 to i32
    %c0_i32_15 = arith.constant 0 : i32
    %18 = arith.cmpi ne, %17, %c0_i32_15 : i32
    scf.if %18 {
      %c0_16 = arith.constant 0 : index
      %c0_17 = arith.constant 0 : index
      %19 = vector.load %arg8[%c0_16, %c0_17] : memref<24x128xf32, #tpu.memory_space<vmem>>, vector<24x128xf32>
      %c0_18 = arith.constant 0 : index
      %c0_19 = arith.constant 0 : index
      %20 = vector.load %arg6[%c0_18, %c0_19] : memref<1x128xf32, #tpu.memory_space<vmem>>, vector<1x128xf32>
      %21 = vector.broadcast %20 : vector<1x128xf32> to vector<24x128xf32>
      %22 = arith.addf %19, %21 : vector<24x128xf32>
      %c0_20 = arith.constant 0 : index
      %c0_21 = arith.constant 0 : index
      %23 = vector.load %arg7[%c0_20, %c0_21] : memref<24x128xf32, #tpu.memory_space<vmem>>, vector<24x128xf32>
      tpu.vector_store %arg7[%c0_20, %c0_21], %22 {strides = array<i32>} : memref<24x128xf32, #tpu.memory_space<vmem>>, vector<24x128xf32>,
    } else {
    }
    return
  }
  func.func @transform_0(%arg0: i32, %arg1: i32) -> (i32, i32) {
    %c0_i32 = arith.constant 0 : i32
    %c0_i32_0 = arith.constant 0 : i32
    return %arg0, %c0_i32 : i32, i32
  }
  func.func @transform_1(%arg0: i32, %arg1: i32) -> (i32, i32) {
    %c0_i32 = arith.constant 0 : i32
    %c0_i32_0 = arith.constant 0 : i32
    return %c0_i32, %arg1 : i32, i32
  }
  func.func @transform_2(%arg0: i32, %arg1: i32) -> (i32, i32) {
    %c0_i32 = arith.constant 0 : i32
    %c0_i32_0 = arith.constant 0 : i32
    return %c0_i32, %arg1 : i32, i32
  }
  func.func @transform_3(%arg0: i32, %arg1: i32) -> (i32, i32) {
    %c0_i32 = arith.constant 0 : i32
    %c0_i32_0 = arith.constant 0 : i32
    return %arg1, %c0_i32 : i32, i32
  }
  func.func @transform_4(%arg0: i32, %arg1: i32) -> (i32, i32) {
    %c0_i32 = arith.constant 0 : i32
    %c0_i32_0 = arith.constant 0 : i32
    %c0_i32_1 = arith.constant 0 : i32
    return %c0_i32, %c0_i32_0 : i32, i32
  }
  func.func @transform_5(%arg0: i32, %arg1: i32) -> (i32, i32) {
    %c0_i32 = arith.constant 0 : i32
    %c0_i32_0 = arith.constant 0 : i32
    return %arg0, %c0_i32 : i32, i32
  }
}

module attributes {stable_mosaic.version = 11 : i64} {
  func.func @_mlp_kernel(%arg0: i32, %arg1: i32, %arg2: memref<24x128xf32, #tpu.memory_space<vmem>>, %arg3: memref<128x128xf32, #tpu.memory_space<vmem>>, %arg4: memref<1x128xf32, #tpu.memory_space<vmem>>, %arg5: memref<128x128xf32, #tpu.memory_space<vmem>>, %arg6: memref<1x128xf32, #tpu.memory_space<vmem>>, %arg7: memref<24x128xf32, #tpu.memory_space<vmem>>, %arg8: memref<24x128xf32, #tpu.memory_space<vmem>>) attributes {dimension_semantics = [#tpu.dimension_semantics<parallel>, #tpu.dimension_semantics<arbitrary>], iteration_bounds = array<i64: 1, 1>, scalar_prefetch = 0 : i64, scratch_operands = 1 : i64, tpu.core_type = #tpu.core_type<tc>, window_params = [{transform_indices = @transform_0, window_bounds = array<i64: 24, 128>}, {transform_indices = @transform_1, window_bounds = array<i64: 128, 128>}, {transform_indices = @transform_2, window_bounds = array<i64: 1, 128>}, {transform_indices = @transform_3, window_bounds = array<i64: 128, 128>}, {pipeline_mode = #tpu.pipeline_mode<synchronous>, transform_indices = @transform_4, window_bounds = array<i64: 1, 128>}, {transform_indices = @transform_5, window_bounds = array<i64: 24, 128>}]} {
    %c0_i32 = arith.constant 0 : i32
    %0 = arith.cmpi eq, %arg1, %c0_i32 : i32
    %1 = arith.extui %0 : i1 to i32
    %c0_i32_0 = arith.constant 0 : i32
    %2 = arith.cmpi ne, %1, %c0_i32_0 : i32
    scf.if %2 {
      %cst_16 = arith.constant 0.000000e+00 : f32
      %19 = vector.broadcast %cst_16 : f32 to vector<24x128xf32>
      %c0_17 = arith.constant 0 : index
      %c0_18 = arith.constant 0 : index
      %20 = vector.load %arg8[%c0_17, %c0_18] : memref<24x128xf32, #tpu.memory_space<vmem>>, vector<24x128xf32>
      tpu.vector_store %arg8[%c0_17, %c0_18], %19 {strides = array<i32>} : memref<24x128xf32, #tpu.memory_space<vmem>>, vector<24x128xf32>,
    } else {
    }
    %c0 = arith.constant 0 : index
    %c0_1 = arith.constant 0 : index
    %3 = vector.load %arg2[%c0, %c0_1] : memref<24x128xf32, #tpu.memory_space<vmem>>, vector<24x128xf32>
    %c0_2 = arith.constant 0 : index
    %c0_3 = arith.constant 0 : index
    %4 = vector.load %arg3[%c0_2, %c0_3] : memref<128x128xf32, #tpu.memory_space<vmem>>, vector<128x128xf32>
    %cst = arith.constant dense<0.000000e+00> : vector<24x128xf32>
    %5 = tpu.matmul %3, %4, %cst {dimension_numbers = #tpu.dot_dimension_numbers<[1], [0], [0], [1], [0, 0, 1, 1], [], []>} : vector<24x128xf32>, vector<128x128xf32>, vector<24x128xf32> -> vector<24x128xf32>
    %c0_4 = arith.constant 0 : index
    %c0_5 = arith.constant 0 : index
    %6 = vector.load %arg4[%c0_4, %c0_5] : memref<1x128xf32, #tpu.memory_space<vmem>>, vector<1x128xf32>
    %7 = vector.broadcast %6 : vector<1x128xf32> to vector<24x128xf32>
    %8 = arith.addf %5, %7 : vector<24x128xf32>
    %cst_6 = arith.constant 0.000000e+00 : f32
    %9 = vector.broadcast %cst_6 : f32 to vector<24x128xf32>
    %10 = arith.maximumf %8, %9 : vector<24x128xf32>
    %c0_7 = arith.constant 0 : index
    %c0_8 = arith.constant 0 : index
    %11 = vector.load %arg8[%c0_7, %c0_8] : memref<24x128xf32, #tpu.memory_space<vmem>>, vector<24x128xf32>
    %c0_9 = arith.constant 0 : index
    %c0_10 = arith.constant 0 : index
    %12 = vector.load %arg5[%c0_9, %c0_10] : memref<128x128xf32, #tpu.memory_space<vmem>>, vector<128x128xf32>
    %cst_11 = arith.constant dense<0.000000e+00> : vector<24x128xf32>
    %13 = tpu.matmul %10, %12, %cst_11 {dimension_numbers = #tpu.dot_dimension_numbers<[1], [0], [0], [1], [0, 0, 1, 1], [], []>} : vector<24x128xf32>, vector<128x128xf32>, vector<24x128xf32> -> vector<24x128xf32>
    %14 = arith.addf %11, %13 : vector<24x128xf32>
    %c0_12 = arith.constant 0 : index
    %c0_13 = arith.constant 0 : index
    %15 = vector.load %arg8[%c0_12, %c0_13] : memref<24x128xf32, #tpu.memory_space<vmem>>, vector<24x128xf32>
    tpu.vector_store %arg8[%c0_12, %c0_13], %14 {strides = array<i32>} : memref<24x128xf32, #tpu.memory_space<vmem>>, vector<24x128xf32>,
    %c0_i32_14 = arith.constant 0 : i32
    %16 = arith.cmpi eq, %arg1, %c0_i32_14 : i32
    %17 = arith.extui %16 : i1 to i32
    %c0_i32_15 = arith.constant 0 : i32
    %18 = arith.cmpi ne, %17, %c0_i32_15 : i32
    scf.if %18 {
      %c0_16 = arith.constant 0 : index
      %c0_17 = arith.constant 0 : index
      %19 = vector.load %arg8[%c0_16, %c0_17] : memref<24x128xf32, #tpu.memory_space<vmem>>, vector<24x128xf32>
      %c0_18 = arith.constant 0 : index
      %c0_19 = arith.constant 0 : index
      %20 = vector.load %arg6[%c0_18, %c0_19] : memref<1x128xf32, #tpu.memory_space<vmem>>, vector<1x128xf32>
      %21 = vector.broadcast %20 : vector<1x128xf32> to vector<24x128xf32>
      %22 = arith.addf %19, %21 : vector<24x128xf32>
      %c0_20 = arith.constant 0 : index
      %c0_21 = arith.constant 0 : index
      %23 = vector.load %arg7[%c0_20, %c0_21] : memref<24x128xf32, #tpu.memory_space<vmem>>, vector<24x128xf32>
      tpu.vector_store %arg7[%c0_20, %c0_21], %22 {strides = array<i32>} : memref<24x128xf32, #tpu.memory_space<vmem>>, vector<24x128xf32>,
    } else {
    }
    return
  }
  func.func @transform_0(%arg0: i32, %arg1: i32) -> (i32, i32) {
    %c0_i32 = arith.constant 0 : i32
    %c0_i32_0 = arith.constant 0 : i32
    return %arg0, %c0_i32 : i32, i32
  }
  func.func @transform_1(%arg0: i32, %arg1: i32) -> (i32, i32) {
    %c0_i32 = arith.constant 0 : i32
    %c0_i32_0 = arith.constant 0 : i32
    return %c0_i32, %arg1 : i32, i32
  }
  func.func @transform_2(%arg0: i32, %arg1: i32) -> (i32, i32) {
    %c0_i32 = arith.constant 0 : i32
    %c0_i32_0 = arith.constant 0 : i32
    return %c0_i32, %arg1 : i32, i32
  }
  func.func @transform_3(%arg0: i32, %arg1: i32) -> (i32, i32) {
    %c0_i32 = arith.constant 0 : i32
    %c0_i32_0 = arith.constant 0 : i32
    return %arg1, %c0_i32 : i32, i32
  }
  func.func @transform_4(%arg0: i32, %arg1: i32) -> (i32, i32) {
    %c0_i32 = arith.constant 0 : i32
    %c0_i32_0 = arith.constant 0 : i32
    %c0_i32_1 = arith.constant 0 : i32
    return %c0_i32, %c0_i32_0 : i32, i32
  }
  func.func @transform_5(%arg0: i32, %arg1: i32) -> (i32, i32) {
    %c0_i32 = arith.constant 0 : i32
    %c0_i32_0 = arith.constant 0 : i32
    return %arg0, %c0_i32 : i32, i32
  }
}

</mosaic_0001>

<llo_original>
// kernel: tpu_custom_call.1
$region0: #{tpu_custom_call.1}
  #allocation0 [shape = 'u32[]', space=smem, size = 0x4, offset = 0x4, fixed_abs, tag = 'smem constant byte address 0x4 - core index']
  #allocation1 [shape = 'u32[144,128]{1,0:T(1,128)}', space=vmem, size = 0x12000, scoped, tag = 'internal scratch']
  #allocation2 [shape = 'f32[24,128]{1,0:T(8,128)}', space=vmem, size = 0x3000, scoped, tag = 'scratch operand']
  %s0 = inlined_call_operand.hbm [shape: f32[20,128], index: 0, kind: input, shape index: {}]
  %s1 = inlined_call_operand.hbm [shape: f32[128,128], index: 1, kind: input, shape index: {}]
  %s2 = inlined_call_operand.vmem [shape: f32[1,128], index: 2, kind: input, shape index: {}]
  %s3 = inlined_call_operand.hbm [shape: f32[128,128], index: 3, kind: input, shape index: {}]
  %s4 = inlined_call_operand.vmem [shape: f32[1,128], index: 4, kind: input, shape index: {}]
  %s5 = inlined_call_operand.hbm [shape: f32[20,128], index: 5, kind: output, shape index: {}]
  %s6 = sld [smem:[#allocation0]]
  $region50: #{tpu_custom_call.1} parent=0
    _
  %s8 = ssub.s32 1, %s6
  %s9 = scalar_select 0, %s8, %s6
  $region1: #{tpu_custom_call.1} parent=0
    #allocation3 [shape = 'u8[12288]{0}', space=vmem, size = 0x3000, scoped, tag = 'input window, operand 0, single buffered']
    #allocation4 [shape = 's32[1]{0}', space=sflag, size = 0x4, scoped, tag = 'scoped memory for tpu_custom_call.1']
    #allocation5 [shape = 's32[1]{0}', space=sflag, size = 0x4, scoped, tag = 'scoped memory for tpu_custom_call.1']
    #allocation6 [shape = 'u8[65536]{0}', space=vmem, size = 0x10000, scoped, tag = 'input window, operand 1, single buffered']
    #allocation7 [shape = 's32[1]{0}', space=sflag, size = 0x4, scoped, tag = 'scoped memory for tpu_custom_call.1']
    #allocation8 [shape = 'u8[65536]{0}', space=vmem, size = 0x10000, scoped, tag = 'input window, operand 3, single buffered']
    #allocation9 [shape = 'u8[12288]{0}', space=vmem, size = 0x3000, scoped, tag = 'output window, operand 0, single buffered']
    %10 = vsyncpa [#allocation4], 0
    %11 = vsyncpa [#allocation7], 0
    %12 = vsyncpa [#allocation5], 0
    // Predicated region
    $region2: #{tpu_custom_call.1} parent=1 // pred_check
      _
    $region3: #{tpu_custom_call.1} parent=1 // pred_check_branch
      %14 = sbr.rel (0) target = $region5
    $region4: #{tpu_custom_call.1} parent=1 // pred_region
      %s16 = ssub.s32 384, 384
      %17 = vsyncadd [#allocation4], %s16
      %s18 = sshll.u32 [#allocation3], 4
      %s19 = int_to_ptr.vmem [resolvable:$true] %s18
      %24 = dma.hbm_to_vmem [thread:$0]  %s0, 384, %s19, [#allocation4], 128, 128, 8
    $region5: #{tpu_custom_call.1} parent=1 // pred_fallthru
      _
    // Predicated region
    $region6: #{tpu_custom_call.1} parent=1 // pred_check
      _
    $region7: #{tpu_custom_call.1} parent=1 // pred_check_branch
      %26 = sbr.rel (0) target = $region9
    $region8: #{tpu_custom_call.1} parent=1 // pred_region
      %s28 = ssub.s32 2048, 2048
      %29 = vsyncadd [#allocation7], %s28
      %s30 = sshll.u32 [#allocation6], 4
      %s31 = int_to_ptr.vmem [resolvable:$true] %s30
      %36 = dma.hbm_to_vmem [thread:$0]  %s1, 2048, %s31, [#allocation7], 128, 128, 8
    $region9: #{tpu_custom_call.1} parent=1 // pred_fallthru
      _
    // Predicated region
    $region10: #{tpu_custom_call.1} parent=1 // pred_check
      _
    $region11: #{tpu_custom_call.1} parent=1 // pred_check_branch
      %38 = sbr.rel (0) target = $region13
    $region12: #{tpu_custom_call.1} parent=1 // pred_region
      _
    $region13: #{tpu_custom_call.1} parent=1 // pred_fallthru
      _
    // Predicated region
    $region14: #{tpu_custom_call.1} parent=1 // pred_check
      _
    $region15: #{tpu_custom_call.1} parent=1 // pred_check_branch
      %40 = sbr.rel (0) target = $region17
    $region16: #{tpu_custom_call.1} parent=1 // pred_region
      %s42 = ssub.s32 2048, 2048
      %43 = vsyncadd [#allocation7], %s42
      %s44 = sshll.u32 [#allocation8], 4
      %s45 = int_to_ptr.vmem [resolvable:$true] %s44
      %50 = dma.hbm_to_vmem [thread:$0]  %s3, 2048, %s45, [#allocation7], 128, 128, 8
    $region17: #{tpu_custom_call.1} parent=1 // pred_fallthru
      _
    // Predicated region
    $region18: #{tpu_custom_call.1} parent=1 // pred_check
      _
    $region19: #{tpu_custom_call.1} parent=1 // pred_check_branch
      %52 = sbr.rel (0) target = $region21
    $region20: #{tpu_custom_call.1} parent=1 // pred_region
      _
    $region21: #{tpu_custom_call.1} parent=1 // pred_fallthru
      _
    // Predicated region
    $region22: #{tpu_custom_call.1} parent=1 // pred_check
      _
    $region23: #{tpu_custom_call.1} parent=1 // pred_check_branch
      %54 = sbr.rel (0) target = $region25
    $region24: #{tpu_custom_call.1} parent=1 // pred_region
      %55 = dma.done [#allocation4], 384
    $region25: #{tpu_custom_call.1} parent=1 // pred_fallthru
      _
    // Predicated region
    $region26: #{tpu_custom_call.1} parent=1 // pred_check
      _
    $region27: #{tpu_custom_call.1} parent=1 // pred_check_branch
      %57 = sbr.rel (0) target = $region29
    $region28: #{tpu_custom_call.1} parent=1 // pred_region
      %58 = dma.done [#allocation7], 2048
    $region29: #{tpu_custom_call.1} parent=1 // pred_fallthru
      _
    // Predicated region
    $region30: #{tpu_custom_call.1} parent=1 // pred_check
      _
    $region31: #{tpu_custom_call.1} parent=1 // pred_check_branch
      %60 = sbr.rel (0) target = $region33
    $region32: #{tpu_custom_call.1} parent=1 // pred_region
      %61 = dma.done [#allocation7], 2048
    $region33: #{tpu_custom_call.1} parent=1 // pred_fallthru
      _
    %p62 = scmp.eq.s32.totalorder 0, 0
    // Predicated region
    $region34: #{tpu_custom_call.1} parent=1 // pred_check
      %p63 = pneg %p62
    $region35: #{tpu_custom_call.1} parent=1 // pred_check_branch
      %65 = sbr.rel (%p63) target = $region37
    $region36: #{tpu_custom_call.1} parent=1 // pred_region
      %66 = vst [vmem:[#allocation2] sm:$0xff] 0.0
      %67 = vst [vmem:[#allocation2 + $0x8] sm:$0xff] 0.0
      %68 = vst [vmem:[#allocation2 + $0x10] sm:$0xff] 0.0
    $region37: #{tpu_custom_call.1} parent=1 // pred_fallthru
      _
    %v69 = vld [vmem:[#allocation3] sm:$0xff]
    %v70 = vld [vmem:[#allocation3 + $0x8] sm:$0xff]
    %v71 = vld [vmem:[#allocation3 + $0x10] sm:$0xff]
    %v72 = vld [vmem:[#allocation6] sm:$0xff]
    %v73 = vld [vmem:[#allocation6 + $0x8] sm:$0xff]
    %v74 = vld [vmem:[#allocation6 + $0x10] sm:$0xff]
    %v75 = vld [vmem:[#allocation6 + $0x18] sm:$0xff]
    %v76 = vld [vmem:[#allocation6 + $0x20] sm:$0xff]
    %v77 = vld [vmem:[#allocation6 + $0x28] sm:$0xff]
    %v78 = vld [vmem:[#allocation6 + $0x30] sm:$0xff]
    %v79 = vld [vmem:[#allocation6 + $0x38] sm:$0xff]
    %v80 = vld [vmem:[#allocation6 + $0x40] sm:$0xff]
    %v81 = vld [vmem:[#allocation6 + $0x48] sm:$0xff]
    %v82 = vld [vmem:[#allocation6 + $0x50] sm:$0xff]
    %v83 = vld [vmem:[#allocation6 + $0x58] sm:$0xff]
    %v84 = vld [vmem:[#allocation6 + $0x60] sm:$0xff]
    %v85 = vld [vmem:[#allocation6 + $0x68] sm:$0xff]
    %v86 = vld [vmem:[#allocation6 + $0x70] sm:$0xff]
    %v87 = vld [vmem:[#allocation6 + $0x78] sm:$0xff]
    %v88 = vld [vmem:[%s2] sm:$0x1]
    %v90 = vlaneseq
    %v91 = vshrl.u32 %v90, 7
    %v92 = vsub.s32 0, %v91
    %v93 = vrot.slane %v88, %v92
    %95 = vmatprep.subr.mxu0 0.0
    %96 = vmatpush1.msra.mxu0 %v72
    %97 = vmatprep.subr.mxu0 0.0
    %98 = vmatpush1.msra.mxu0 %v73
    %99 = vmatprep.subr.mxu0 0.0
    %100 = vmatpush1.msra.mxu0 %v74
    %101 = vmatprep.subr.mxu0 0.0
    %102 = vmatpush1.msra.mxu0 %v75
    %103 = vmatprep.subr.mxu0 0.0
    %104 = vmatpush1.msra.mxu0 %v76
    %105 = vmatprep.subr.mxu0 0.0
    %106 = vmatpush1.msra.mxu0 %v77
    %107 = vmatprep.subr.mxu0 0.0
    %108 = vmatpush1.msra.mxu0 %v78
    %109 = vmatprep.subr.mxu0 0.0
    %110 = vmatpush1.msra.mxu0 %v79
    %111 = vmatprep.subr.mxu0 0.0
    %112 = vmatpush1.msra.mxu0 %v80
    %113 = vmatprep.subr.mxu0 0.0
    %114 = vmatpush1.msra.mxu0 %v81
    %115 = vmatprep.subr.mxu0 0.0
    %116 = vmatpush1.msra.mxu0 %v82
    %117 = vmatprep.subr.mxu0 0.0
    %118 = vmatpush1.msra.mxu0 %v83
    %119 = vmatprep.subr.mxu0 0.0
    %120 = vmatpush1.msra.mxu0 %v84
    %121 = vmatprep.subr.mxu0 0.0
    %122 = vmatpush1.msra.mxu0 %v85
    %123 = vmatprep.subr.mxu0 0.0
    %124 = vmatpush1.msra.mxu0 %v86
    %125 = vmatprep.subr.mxu0 0.0
    %126 = vmatpush1.msra.mxu0 %v87
    %127 = vmatprep.subr.mxu0 0.0
    %128 = vmatpush1.msra.mxu0 0.0
    %129 = vmatprep.subr.mxu0 0.0
    %130 = vmatpush1.msra.mxu0 0.0
    %131 = vmatprep.subr.mxu0 0.0
    %132 = vmatpush1.msra.mxu0 0.0
    %133 = vmatprep.subr.mxu0 0.0
    %134 = vmatpush1.msra.mxu0 0.0
    %135 = vmatprep.subr.mxu0 0.0
    %136 = vmatpush1.msra.mxu0 0.0
    %137 = vmatprep.subr.mxu0 0.0
    %138 = vmatpush1.msra.mxu0 0.0
    %139 = vmatprep.subr.mxu0 0.0
    %140 = vmatpush1.msra.mxu0 0.0
    %141 = vmatprep.subr.mxu0 0.0
    %142 = vmatpush1.msra.mxu0 0.0
    %143 = vmatprep.subr.mxu0 0.0
    %144 = vmatpush1.msra.mxu0 0.0
    %145 = vmatprep.subr.mxu0 0.0
    %146 = vmatpush1.msra.mxu0 0.0
    %147 = vmatprep.subr.mxu0 0.0
    %148 = vmatpush1.msra.mxu0 0.0
    %149 = vmatprep.subr.mxu0 0.0
    %150 = vmatpush1.msra.mxu0 0.0
    %151 = vmatprep.subr.mxu0 0.0
    %152 = vmatpush1.msra.mxu0 0.0
    %153 = vmatprep.subr.mxu0 0.0
    %154 = vmatpush1.msra.mxu0 0.0
    %155 = vmatprep.subr.mxu0 0.0
    %156 = vmatpush1.msra.mxu0 0.0
    %157 = vmatprep.subr.mxu0 0.0
    %158 = vmatpush1.msra.mxu0 0.0
    %159 = vmatprep.mubr.f32.mxu0 0.0
    %160 = vmatmul.mubr.f32.gmra.mrb[0].mxu0 %v69
    %v161 = vpop.f32.mrb[0].mxu0
    %v162 = vadd.f32 %v93, %v161
    %v163 = vpop.f32.mrb[0].mxu0
    %164 = vmatprep.mubr.f32.mxu0 0.0
    %165 = vmatmul.mubr.f32.gmra.mrb[0].mxu0 %v70
    %v166 = vpop.f32.mrb[0].mxu0
    %v167 = vadd.f32 %v93, %v166
    %v168 = vpop.f32.mrb[0].mxu0
    %169 = vmatprep.mubr.f32.mxu0 0.0
    %170 = vmatmul.mubr.f32.gmra.mrb[0].mxu0 %v71
    %v171 = vpop.f32.mrb[0].mxu0
    %v172 = vadd.f32 %v93, %v171
    %v173 = vpop.f32.mrb[0].mxu0
    %174 = vdwg.mxu0
    %v175 = vmax.f32 %v162, 0.0
    %v176 = vmax.f32 %v167, 0.0
    %v177 = vmax.f32 %v172, 0.0
    %v178 = vld [vmem:[#allocation2] sm:$0xff]
    %v179 = vld [vmem:[#allocation2 + $0x8] sm:$0xff]
    %v180 = vld [vmem:[#allocation2 + $0x10] sm:$0xff]
    %v181 = vld [vmem:[#allocation8] sm:$0xff]
    %v182 = vld [vmem:[#allocation8 + $0x8] sm:$0xff]
    %v183 = vld [vmem:[#allocation8 + $0x10] sm:$0xff]
    %v184 = vld [vmem:[#allocation8 + $0x18] sm:$0xff]
    %v185 = vld [vmem:[#allocation8 + $0x20] sm:$0xff]
    %v186 = vld [vmem:[#allocation8 + $0x28] sm:$0xff]
    %v187 = vld [vmem:[#allocation8 + $0x30] sm:$0xff]
    %v188 = vld [vmem:[#allocation8 + $0x38] sm:$0xff]
    %v189 = vld [vmem:[#allocation8 + $0x40] sm:$0xff]
    %v190 = vld [vmem:[#allocation8 + $0x48] sm:$0xff]
    %v191 = vld [vmem:[#allocation8 + $0x50] sm:$0xff]
    %v192 = vld [vmem:[#allocation8 + $0x58] sm:$0xff]
    %v193 = vld [vmem:[#allocation8 + $0x60] sm:$0xff]
    %v194 = vld [vmem:[#allocation8 + $0x68] sm:$0xff]
    %v195 = vld [vmem:[#allocation8 + $0x70] sm:$0xff]
    %v196 = vld [vmem:[#allocation8 + $0x78] sm:$0xff]
    %197 = vmatprep.subr.mxu0 0.0
    %198 = vmatpush1.msra.mxu0 %v181
    %199 = vmatprep.subr.mxu0 0.0
    %200 = vmatpush1.msra.mxu0 %v182
    %201 = vmatprep.subr.mxu0 0.0
    %202 = vmatpush1.msra.mxu0 %v183
    %203 = vmatprep.subr.mxu0 0.0
    %204 = vmatpush1.msra.mxu0 %v184
    %205 = vmatprep.subr.mxu0 0.0
    %206 = vmatpush1.msra.mxu0 %v185
    %207 = vmatprep.subr.mxu0 0.0
    %208 = vmatpush1.msra.mxu0 %v186
    %209 = vmatprep.subr.mxu0 0.0
    %210 = vmatpush1.msra.mxu0 %v187
    %211 = vmatprep.subr.mxu0 0.0
    %212 = vmatpush1.msra.mxu0 %v188
    %213 = vmatprep.subr.mxu0 0.0
    %214 = vmatpush1.msra.mxu0 %v189
    %215 = vmatprep.subr.mxu0 0.0
    %216 = vmatpush1.msra.mxu0 %v190
    %217 = vmatprep.subr.mxu0 0.0
    %218 = vmatpush1.msra.mxu0 %v191
    %219 = vmatprep.subr.mxu0 0.0
    %220 = vmatpush1.msra.mxu0 %v192
    %221 = vmatprep.subr.mxu0 0.0
    %222 = vmatpush1.msra.mxu0 %v193
    %223 = vmatprep.subr.mxu0 0.0
    %224 = vmatpush1.msra.mxu0 %v194
    %225 = vmatprep.subr.mxu0 0.0
    %226 = vmatpush1.msra.mxu0 %v195
    %227 = vmatprep.subr.mxu0 0.0
    %228 = vmatpush1.msra.mxu0 %v196
    %229 = vmatprep.subr.mxu0 0.0
    %230 = vmatpush1.msra.mxu0 0.0
    %231 = vmatprep.subr.mxu0 0.0
    %232 = vmatpush1.msra.mxu0 0.0
    %233 = vmatprep.subr.mxu0 0.0
    %234 = vmatpush1.msra.mxu0 0.0
    %235 = vmatprep.subr.mxu0 0.0
    %236 = vmatpush1.msra.mxu0 0.0
    %237 = vmatprep.subr.mxu0 0.0
    %238 = vmatpush1.msra.mxu0 0.0
    %239 = vmatprep.subr.mxu0 0.0
    %240 = vmatpush1.msra.mxu0 0.0
    %241 = vmatprep.subr.mxu0 0.0
    %242 = vmatpush1.msra.mxu0 0.0
    %243 = vmatprep.subr.mxu0 0.0
    %244 = vmatpush1.msra.mxu0 0.0
    %245 = vmatprep.subr.mxu0 0.0
    %246 = vmatpush1.msra.mxu0 0.0
    %247 = vmatprep.subr.mxu0 0.0
    %248 = vmatpush1.msra.mxu0 0.0
    %249 = vmatprep.subr.mxu0 0.0
    %250 = vmatpush1.msra.mxu0 0.0
    %251 = vmatprep.subr.mxu0 0.0
    %252 = vmatpush1.msra.mxu0 0.0
    %253 = vmatprep.subr.mxu0 0.0
    %254 = vmatpush1.msra.mxu0 0.0
    %255 = vmatprep.subr.mxu0 0.0
    %256 = vmatpush1.msra.mxu0 0.0
    %257 = vmatprep.subr.mxu0 0.0
    %258 = vmatpush1.msra.mxu0 0.0
    %259 = vmatprep.subr.mxu0 0.0
    %260 = vmatpush1.msra.mxu0 0.0
    %261 = vmatprep.mubr.f32.mxu0 0.0
    %262 = vmatmul.mubr.f32.gmra.mrb[0].mxu0 %v175
    %v263 = vpop.f32.mrb[0].mxu0
    %v264 = vadd.f32 0.0, %v263
    %v265 = vpop.f32.mrb[0].mxu0
    %266 = vmatprep.mubr.f32.mxu0 0.0
    %267 = vmatmul.mubr.f32.gmra.mrb[0].mxu0 %v176
    %v268 = vpop.f32.mrb[0].mxu0
    %v269 = vadd.f32 0.0, %v268
    %v270 = vpop.f32.mrb[0].mxu0
    %271 = vmatprep.mubr.f32.mxu0 0.0
    %272 = vmatmul.mubr.f32.gmra.mrb[0].mxu0 %v177
    %v273 = vpop.f32.mrb[0].mxu0
    %v274 = vadd.f32 0.0, %v273
    %v275 = vpop.f32.mrb[0].mxu0
    %276 = vdwg.mxu0
    %v277 = vadd.f32 %v178, %v264
    %v278 = vadd.f32 %v179, %v269
    %v279 = vadd.f32 %v180, %v274
    %280 = vst [vmem:[#allocation2] sm:$0xff] %v277
    %281 = vst [vmem:[#allocation2 + $0x8] sm:$0xff] %v278
    %282 = vst [vmem:[#allocation2 + $0x10] sm:$0xff] %v279
    // Predicated region
    $region38: #{tpu_custom_call.1} parent=1 // pred_check
      %p283 = pneg %p62
    $region39: #{tpu_custom_call.1} parent=1 // pred_check_branch
      %285 = sbr.rel (%p283) target = $region41
    $region40: #{tpu_custom_call.1} parent=1 // pred_region
      %v286 = vld [vmem:[#allocation2] sm:$0xff]
      %v287 = vld [vmem:[#allocation2 + $0x8] sm:$0xff]
      %v288 = vld [vmem:[#allocation2 + $0x10] sm:$0xff]
      %v289 = vld [vmem:[%s4] sm:$0x1]
      %v291 = vlaneseq
      %v292 = vshrl.u32 %v291, 7
      %v293 = vsub.s32 0, %v292
      %v294 = vrot.slane %v289, %v293
      %v296 = vadd.f32 %v286, %v294
      %v297 = vadd.f32 %v287, %v294
      %v298 = vadd.f32 %v288, %v294
      %299 = vst [vmem:[#allocation9] sm:$0xff] %v296
      %300 = vst [vmem:[#allocation9 + $0x8] sm:$0xff] %v297
      %301 = vst [vmem:[#allocation9 + $0x10] sm:$0xff] %v298
    $region41: #{tpu_custom_call.1} parent=1 // pred_fallthru
      _
    // Predicated region
    $region42: #{tpu_custom_call.1} parent=1 // pred_check
      _
    $region43: #{tpu_custom_call.1} parent=1 // pred_check_branch
      %303 = sbr.rel (0) target = $region45
    $region44: #{tpu_custom_call.1} parent=1 // pred_region
      %s305 = ssub.s32 384, 384
      %306 = vsyncadd [#allocation5], %s305
      %s307 = sshll.u32 [#allocation9], 4
      %s308 = int_to_ptr.vmem [resolvable:$true] %s307
      %313 = dma.vmem_to_hbm [thread:$0]  %s308, 384, %s5, [#allocation5], 128, 128, 8
    $region45: #{tpu_custom_call.1} parent=1 // pred_fallthru
      _
    // Predicated region
    $region46: #{tpu_custom_call.1} parent=1 // pred_check
      _
    $region47: #{tpu_custom_call.1} parent=1 // pred_check_branch
      %315 = sbr.rel (0) target = $region49
    $region48: #{tpu_custom_call.1} parent=1 // pred_region
      %316 = dma.done [#allocation5], 384
    $region49: #{tpu_custom_call.1} parent=1 // pred_fallthru
      _
    %317 = vsyncpa [#allocation4], 1
    %318 = vsyncpa [#allocation7], 1
    %319 = vsyncpa [#allocation5], 1

// kernel: tpu_custom_call.1
$region0: #{tpu_custom_call.1}
  #allocation0 [shape = 'u32[]', space=smem, size = 0x4, offset = 0x4, fixed_abs, tag = 'smem constant byte address 0x4 - core index']
  #allocation1 [shape = 'u32[144,128]{1,0:T(1,128)}', space=vmem, size = 0x12000, scoped, tag = 'internal scratch']
  #allocation2 [shape = 'f32[24,128]{1,0:T(8,128)}', space=vmem, size = 0x3000, scoped, tag = 'scratch operand']
  %s0 = inlined_call_operand.hbm [shape: f32[20,128], index: 0, kind: input, shape index: {}]
  %s1 = inlined_call_operand.hbm [shape: f32[128,128], index: 1, kind: input, shape index: {}]
  %s2 = inlined_call_operand.vmem [shape: f32[1,128], index: 2, kind: input, shape index: {}]
  %s3 = inlined_call_operand.hbm [shape: f32[128,128], index: 3, kind: input, shape index: {}]
  %s4 = inlined_call_operand.vmem [shape: f32[1,128], index: 4, kind: input, shape index: {}]
  %s5 = inlined_call_operand.hbm [shape: f32[20,128], index: 5, kind: output, shape index: {}]
  %s6 = sld [smem:[#allocation0]]
  $region50: #{tpu_custom_call.1} parent=0
    _
  %s8 = ssub.s32 1, %s6
  %s9 = scalar_select 0, %s8, %s6
  $region1: #{tpu_custom_call.1} parent=0
    #allocation3 [shape = 'u8[12288]{0}', space=vmem, size = 0x3000, scoped, tag = 'input window, operand 0, single buffered']
    #allocation4 [shape = 's32[1]{0}', space=sflag, size = 0x4, scoped, tag = 'scoped memory for tpu_custom_call.1']
    #allocation5 [shape = 's32[1]{0}', space=sflag, size = 0x4, scoped, tag = 'scoped memory for tpu_custom_call.1']
    #allocation6 [shape = 'u8[65536]{0}', space=vmem, size = 0x10000, scoped, tag = 'input window, operand 1, single buffered']
    #allocation7 [shape = 's32[1]{0}', space=sflag, size = 0x4, scoped, tag = 'scoped memory for tpu_custom_call.1']
    #allocation8 [shape = 'u8[65536]{0}', space=vmem, size = 0x10000, scoped, tag = 'input window, operand 3, single buffered']
    #allocation9 [shape = 'u8[12288]{0}', space=vmem, size = 0x3000, scoped, tag = 'output window, operand 0, single buffered']
    %10 = vsyncpa [#allocation4], 0
    %11 = vsyncpa [#allocation7], 0
    %12 = vsyncpa [#allocation5], 0
    // Predicated region
    $region2: #{tpu_custom_call.1} parent=1 // pred_check
      _
    $region3: #{tpu_custom_call.1} parent=1 // pred_check_branch
      %14 = sbr.rel (0) target = $region5
    $region4: #{tpu_custom_call.1} parent=1 // pred_region
      %s16 = ssub.s32 384, 384
      %17 = vsyncadd [#allocation4], %s16
      %s18 = sshll.u32 [#allocation3], 4
      %s19 = int_to_ptr.vmem [resolvable:$true] %s18
      %24 = dma.hbm_to_vmem [thread:$0]  %s0, 384, %s19, [#allocation4], 128, 128, 8
    $region5: #{tpu_custom_call.1} parent=1 // pred_fallthru
      _
    // Predicated region
    $region6: #{tpu_custom_call.1} parent=1 // pred_check
      _
    $region7: #{tpu_custom_call.1} parent=1 // pred_check_branch
      %26 = sbr.rel (0) target = $region9
    $region8: #{tpu_custom_call.1} parent=1 // pred_region
      %s28 = ssub.s32 2048, 2048
      %29 = vsyncadd [#allocation7], %s28
      %s30 = sshll.u32 [#allocation6], 4
      %s31 = int_to_ptr.vmem [resolvable:$true] %s30
      %36 = dma.hbm_to_vmem [thread:$0]  %s1, 2048, %s31, [#allocation7], 128, 128, 8
    $region9: #{tpu_custom_call.1} parent=1 // pred_fallthru
      _
    // Predicated region
    $region10: #{tpu_custom_call.1} parent=1 // pred_check
      _
    $region11: #{tpu_custom_call.1} parent=1 // pred_check_branch
      %38 = sbr.rel (0) target = $region13
    $region12: #{tpu_custom_call.1} parent=1 // pred_region
      _
    $region13: #{tpu_custom_call.1} parent=1 // pred_fallthru
      _
    // Predicated region
    $region14: #{tpu_custom_call.1} parent=1 // pred_check
      _
    $region15: #{tpu_custom_call.1} parent=1 // pred_check_branch
      %40 = sbr.rel (0) target = $region17
    $region16: #{tpu_custom_call.1} parent=1 // pred_region
      %s42 = ssub.s32 2048, 2048
      %43 = vsyncadd [#allocation7], %s42
      %s44 = sshll.u32 [#allocation8], 4
      %s45 = int_to_ptr.vmem [resolvable:$true] %s44
      %50 = dma.hbm_to_vmem [thread:$0]  %s3, 2048, %s45, [#allocation7], 128, 128, 8
    $region17: #{tpu_custom_call.1} parent=1 // pred_fallthru
      _
    // Predicated region
    $region18: #{tpu_custom_call.1} parent=1 // pred_check
      _
    $region19: #{tpu_custom_call.1} parent=1 // pred_check_branch
      %52 = sbr.rel (0) target = $region21
    $region20: #{tpu_custom_call.1} parent=1 // pred_region
      _
    $region21: #{tpu_custom_call.1} parent=1 // pred_fallthru
      _
    // Predicated region
    $region22: #{tpu_custom_call.1} parent=1 // pred_check
      _
    $region23: #{tpu_custom_call.1} parent=1 // pred_check_branch
      %54 = sbr.rel (0) target = $region25
    $region24: #{tpu_custom_call.1} parent=1 // pred_region
      %55 = dma.done [#allocation4], 384
    $region25: #{tpu_custom_call.1} parent=1 // pred_fallthru
      _
    // Predicated region
    $region26: #{tpu_custom_call.1} parent=1 // pred_check
      _
    $region27: #{tpu_custom_call.1} parent=1 // pred_check_branch
      %57 = sbr.rel (0) target = $region29
    $region28: #{tpu_custom_call.1} parent=1 // pred_region
      %58 = dma.done [#allocation7], 2048
    $region29: #{tpu_custom_call.1} parent=1 // pred_fallthru
      _
    // Predicated region
    $region30: #{tpu_custom_call.1} parent=1 // pred_check
      _
    $region31: #{tpu_custom_call.1} parent=1 // pred_check_branch
      %60 = sbr.rel (0) target = $region33
    $region32: #{tpu_custom_call.1} parent=1 // pred_region
      %61 = dma.done [#allocation7], 2048
    $region33: #{tpu_custom_call.1} parent=1 // pred_fallthru
      _
    %p62 = scmp.eq.s32.totalorder 0, 0
    // Predicated region
    $region34: #{tpu_custom_call.1} parent=1 // pred_check
      %p63 = pneg %p62
    $region35: #{tpu_custom_call.1} parent=1 // pred_check_branch
      %65 = sbr.rel (%p63) target = $region37
    $region36: #{tpu_custom_call.1} parent=1 // pred_region
      %66 = vst [vmem:[#allocation2] sm:$0xff] 0.0
      %67 = vst [vmem:[#allocation2 + $0x8] sm:$0xff] 0.0
      %68 = vst [vmem:[#allocation2 + $0x10] sm:$0xff] 0.0
    $region37: #{tpu_custom_call.1} parent=1 // pred_fallthru
      _
    %v69 = vld [vmem:[#allocation3] sm:$0xff]
    %v70 = vld [vmem:[#allocation3 + $0x8] sm:$0xff]
    %v71 = vld [vmem:[#allocation3 + $0x10] sm:$0xff]
    %v72 = vld [vmem:[#allocation6] sm:$0xff]
    %v73 = vld [vmem:[#allocation6 + $0x8] sm:$0xff]
    %v74 = vld [vmem:[#allocation6 + $0x10] sm:$0xff]
    %v75 = vld [vmem:[#allocation6 + $0x18] sm:$0xff]
    %v76 = vld [vmem:[#allocation6 + $0x20] sm:$0xff]
    %v77 = vld [vmem:[#allocation6 + $0x28] sm:$0xff]
    %v78 = vld [vmem:[#allocation6 + $0x30] sm:$0xff]
    %v79 = vld [vmem:[#allocation6 + $0x38] sm:$0xff]
    %v80 = vld [vmem:[#allocation6 + $0x40] sm:$0xff]
    %v81 = vld [vmem:[#allocation6 + $0x48] sm:$0xff]
    %v82 = vld [vmem:[#allocation6 + $0x50] sm:$0xff]
    %v83 = vld [vmem:[#allocation6 + $0x58] sm:$0xff]
    %v84 = vld [vmem:[#allocation6 + $0x60] sm:$0xff]
    %v85 = vld [vmem:[#allocation6 + $0x68] sm:$0xff]
    %v86 = vld [vmem:[#allocation6 + $0x70] sm:$0xff]
    %v87 = vld [vmem:[#allocation6 + $0x78] sm:$0xff]
    %v88 = vld [vmem:[%s2] sm:$0x1]
    %v90 = vlaneseq
    %v91 = vshrl.u32 %v90, 7
    %v92 = vsub.s32 0, %v91
    %v93 = vrot.slane %v88, %v92
    %95 = vmatprep.subr.mxu0 0.0
    %96 = vmatpush1.msra.mxu0 %v72
    %97 = vmatprep.subr.mxu0 0.0
    %98 = vmatpush1.msra.mxu0 %v73
    %99 = vmatprep.subr.mxu0 0.0
    %100 = vmatpush1.msra.mxu0 %v74
    %101 = vmatprep.subr.mxu0 0.0
    %102 = vmatpush1.msra.mxu0 %v75
    %103 = vmatprep.subr.mxu0 0.0
    %104 = vmatpush1.msra.mxu0 %v76
    %105 = vmatprep.subr.mxu0 0.0
    %106 = vmatpush1.msra.mxu0 %v77
    %107 = vmatprep.subr.mxu0 0.0
    %108 = vmatpush1.msra.mxu0 %v78
    %109 = vmatprep.subr.mxu0 0.0
    %110 = vmatpush1.msra.mxu0 %v79
    %111 = vmatprep.subr.mxu0 0.0
    %112 = vmatpush1.msra.mxu0 %v80
    %113 = vmatprep.subr.mxu0 0.0
    %114 = vmatpush1.msra.mxu0 %v81
    %115 = vmatprep.subr.mxu0 0.0
    %116 = vmatpush1.msra.mxu0 %v82
    %117 = vmatprep.subr.mxu0 0.0
    %118 = vmatpush1.msra.mxu0 %v83
    %119 = vmatprep.subr.mxu0 0.0
    %120 = vmatpush1.msra.mxu0 %v84
    %121 = vmatprep.subr.mxu0 0.0
    %122 = vmatpush1.msra.mxu0 %v85
    %123 = vmatprep.subr.mxu0 0.0
    %124 = vmatpush1.msra.mxu0 %v86
    %125 = vmatprep.subr.mxu0 0.0
    %126 = vmatpush1.msra.mxu0 %v87
    %127 = vmatprep.subr.mxu0 0.0
    %128 = vmatpush1.msra.mxu0 0.0
    %129 = vmatprep.subr.mxu0 0.0
    %130 = vmatpush1.msra.mxu0 0.0
    %131 = vmatprep.subr.mxu0 0.0
    %132 = vmatpush1.msra.mxu0 0.0
    %133 = vmatprep.subr.mxu0 0.0
    %134 = vmatpush1.msra.mxu0 0.0
    %135 = vmatprep.subr.mxu0 0.0
    %136 = vmatpush1.msra.mxu0 0.0
    %137 = vmatprep.subr.mxu0 0.0
    %138 = vmatpush1.msra.mxu0 0.0
    %139 = vmatprep.subr.mxu0 0.0
    %140 = vmatpush1.msra.mxu0 0.0
    %141 = vmatprep.subr.mxu0 0.0
    %142 = vmatpush1.msra.mxu0 0.0
    %143 = vmatprep.subr.mxu0 0.0
    %144 = vmatpush1.msra.mxu0 0.0
    %145 = vmatprep.subr.mxu0 0.0
    %146 = vmatpush1.msra.mxu0 0.0
    %147 = vmatprep.subr.mxu0 0.0
    %148 = vmatpush1.msra.mxu0 0.0
    %149 = vmatprep.subr.mxu0 0.0
    %150 = vmatpush1.msra.mxu0 0.0
    %151 = vmatprep.subr.mxu0 0.0
    %152 = vmatpush1.msra.mxu0 0.0
    %153 = vmatprep.subr.mxu0 0.0
    %154 = vmatpush1.msra.mxu0 0.0
    %155 = vmatprep.subr.mxu0 0.0
    %156 = vmatpush1.msra.mxu0 0.0
    %157 = vmatprep.subr.mxu0 0.0
    %158 = vmatpush1.msra.mxu0 0.0
    %159 = vmatprep.mubr.f32.mxu0 0.0
    %160 = vmatmul.mubr.f32.gmra.mrb[0].mxu0 %v69
    %v161 = vpop.f32.mrb[0].mxu0
    %v162 = vadd.f32 %v93, %v161
    %v163 = vpop.f32.mrb[0].mxu0
    %164 = vmatprep.mubr.f32.mxu0 0.0
    %165 = vmatmul.mubr.f32.gmra.mrb[0].mxu0 %v70
    %v166 = vpop.f32.mrb[0].mxu0
    %v167 = vadd.f32 %v93, %v166
    %v168 = vpop.f32.mrb[0].mxu0
    %169 = vmatprep.mubr.f32.mxu0 0.0
    %170 = vmatmul.mubr.f32.gmra.mrb[0].mxu0 %v71
    %v171 = vpop.f32.mrb[0].mxu0
    %v172 = vadd.f32 %v93, %v171
    %v173 = vpop.f32.mrb[0].mxu0
    %174 = vdwg.mxu0
    %v175 = vmax.f32 %v162, 0.0
    %v176 = vmax.f32 %v167, 0.0
    %v177 = vmax.f32 %v172, 0.0
    %v178 = vld [vmem:[#allocation2] sm:$0xff]
    %v179 = vld [vmem:[#allocation2 + $0x8] sm:$0xff]
    %v180 = vld [vmem:[#allocation2 + $0x10] sm:$0xff]
    %v181 = vld [vmem:[#allocation8] sm:$0xff]
    %v182 = vld [vmem:[#allocation8 + $0x8] sm:$0xff]
    %v183 = vld [vmem:[#allocation8 + $0x10] sm:$0xff]
    %v184 = vld [vmem:[#allocation8 + $0x18] sm:$0xff]
    %v185 = vld [vmem:[#allocation8 + $0x20] sm:$0xff]
    %v186 = vld [vmem:[#allocation8 + $0x28] sm:$0xff]
    %v187 = vld [vmem:[#allocation8 + $0x30] sm:$0xff]
    %v188 = vld [vmem:[#allocation8 + $0x38] sm:$0xff]
    %v189 = vld [vmem:[#allocation8 + $0x40] sm:$0xff]
    %v190 = vld [vmem:[#allocation8 + $0x48] sm:$0xff]
    %v191 = vld [vmem:[#allocation8 + $0x50] sm:$0xff]
    %v192 = vld [vmem:[#allocation8 + $0x58] sm:$0xff]
    %v193 = vld [vmem:[#allocation8 + $0x60] sm:$0xff]
    %v194 = vld [vmem:[#allocation8 + $0x68] sm:$0xff]
    %v195 = vld [vmem:[#allocation8 + $0x70] sm:$0xff]
    %v196 = vld [vmem:[#allocation8 + $0x78] sm:$0xff]
    %197 = vmatprep.subr.mxu0 0.0
    %198 = vmatpush1.msra.mxu0 %v181
    %199 = vmatprep.subr.mxu0 0.0
    %200 = vmatpush1.msra.mxu0 %v182
    %201 = vmatprep.subr.mxu0 0.0
    %202 = vmatpush1.msra.mxu0 %v183
    %203 = vmatprep.subr.mxu0 0.0
    %204 = vmatpush1.msra.mxu0 %v184
    %205 = vmatprep.subr.mxu0 0.0
    %206 = vmatpush1.msra.mxu0 %v185
    %207 = vmatprep.subr.mxu0 0.0
    %208 = vmatpush1.msra.mxu0 %v186
    %209 = vmatprep.subr.mxu0 0.0
    %210 = vmatpush1.msra.mxu0 %v187
    %211 = vmatprep.subr.mxu0 0.0
    %212 = vmatpush1.msra.mxu0 %v188
    %213 = vmatprep.subr.mxu0 0.0
    %214 = vmatpush1.msra.mxu0 %v189
    %215 = vmatprep.subr.mxu0 0.0
    %216 = vmatpush1.msra.mxu0 %v190
    %217 = vmatprep.subr.mxu0 0.0
    %218 = vmatpush1.msra.mxu0 %v191
    %219 = vmatprep.subr.mxu0 0.0
    %220 = vmatpush1.msra.mxu0 %v192
    %221 = vmatprep.subr.mxu0 0.0
    %222 = vmatpush1.msra.mxu0 %v193
    %223 = vmatprep.subr.mxu0 0.0
    %224 = vmatpush1.msra.mxu0 %v194
    %225 = vmatprep.subr.mxu0 0.0
    %226 = vmatpush1.msra.mxu0 %v195
    %227 = vmatprep.subr.mxu0 0.0
    %228 = vmatpush1.msra.mxu0 %v196
    %229 = vmatprep.subr.mxu0 0.0
    %230 = vmatpush1.msra.mxu0 0.0
    %231 = vmatprep.subr.mxu0 0.0
    %232 = vmatpush1.msra.mxu0 0.0
    %233 = vmatprep.subr.mxu0 0.0
    %234 = vmatpush1.msra.mxu0 0.0
    %235 = vmatprep.subr.mxu0 0.0
    %236 = vmatpush1.msra.mxu0 0.0
    %237 = vmatprep.subr.mxu0 0.0
    %238 = vmatpush1.msra.mxu0 0.0
    %239 = vmatprep.subr.mxu0 0.0
    %240 = vmatpush1.msra.mxu0 0.0
    %241 = vmatprep.subr.mxu0 0.0
    %242 = vmatpush1.msra.mxu0 0.0
    %243 = vmatprep.subr.mxu0 0.0
    %244 = vmatpush1.msra.mxu0 0.0
    %245 = vmatprep.subr.mxu0 0.0
    %246 = vmatpush1.msra.mxu0 0.0
    %247 = vmatprep.subr.mxu0 0.0
    %248 = vmatpush1.msra.mxu0 0.0
    %249 = vmatprep.subr.mxu0 0.0
    %250 = vmatpush1.msra.mxu0 0.0
    %251 = vmatprep.subr.mxu0 0.0
    %252 = vmatpush1.msra.mxu0 0.0
    %253 = vmatprep.subr.mxu0 0.0
    %254 = vmatpush1.msra.mxu0 0.0
    %255 = vmatprep.subr.mxu0 0.0
    %256 = vmatpush1.msra.mxu0 0.0
    %257 = vmatprep.subr.mxu0 0.0
    %258 = vmatpush1.msra.mxu0 0.0
    %259 = vmatprep.subr.mxu0 0.0
    %260 = vmatpush1.msra.mxu0 0.0
    %261 = vmatprep.mubr.f32.mxu0 0.0
    %262 = vmatmul.mubr.f32.gmra.mrb[0].mxu0 %v175
    %v263 = vpop.f32.mrb[0].mxu0
    %v264 = vadd.f32 0.0, %v263
    %v265 = vpop.f32.mrb[0].mxu0
    %266 = vmatprep.mubr.f32.mxu0 0.0
    %267 = vmatmul.mubr.f32.gmra.mrb[0].mxu0 %v176
    %v268 = vpop.f32.mrb[0].mxu0
    %v269 = vadd.f32 0.0, %v268
    %v270 = vpop.f32.mrb[0].mxu0
    %271 = vmatprep.mubr.f32.mxu0 0.0
    %272 = vmatmul.mubr.f32.gmra.mrb[0].mxu0 %v177
    %v273 = vpop.f32.mrb[0].mxu0
    %v274 = vadd.f32 0.0, %v273
    %v275 = vpop.f32.mrb[0].mxu0
    %276 = vdwg.mxu0
    %v277 = vadd.f32 %v178, %v264
    %v278 = vadd.f32 %v179, %v269
    %v279 = vadd.f32 %v180, %v274
    %280 = vst [vmem:[#allocation2] sm:$0xff] %v277
    %281 = vst [vmem:[#allocation2 + $0x8] sm:$0xff] %v278
    %282 = vst [vmem:[#allocation2 + $0x10] sm:$0xff] %v279
    // Predicated region
    $region38: #{tpu_custom_call.1} parent=1 // pred_check
      %p283 = pneg %p62
    $region39: #{tpu_custom_call.1} parent=1 // pred_check_branch
      %285 = sbr.rel (%p283) target = $region41
    $region40: #{tpu_custom_call.1} parent=1 // pred_region
      %v286 = vld [vmem:[#allocation2] sm:$0xff]
      %v287 = vld [vmem:[#allocation2 + $0x8] sm:$0xff]
      %v288 = vld [vmem:[#allocation2 + $0x10] sm:$0xff]
      %v289 = vld [vmem:[%s4] sm:$0x1]
      %v291 = vlaneseq
      %v292 = vshrl.u32 %v291, 7
      %v293 = vsub.s32 0, %v292
      %v294 = vrot.slane %v289, %v293
      %v296 = vadd.f32 %v286, %v294
      %v297 = vadd.f32 %v287, %v294
      %v298 = vadd.f32 %v288, %v294
      %299 = vst [vmem:[#allocation9] sm:$0xff] %v296
      %300 = vst [vmem:[#allocation9 + $0x8] sm:$0xff] %v297
      %301 = vst [vmem:[#allocation9 + $0x10] sm:$0xff] %v298
    $region41: #{tpu_custom_call.1} parent=1 // pred_fallthru
      _
    // Predicated region
    $region42: #{tpu_custom_call.1} parent=1 // pred_check
      _
    $region43: #{tpu_custom_call.1} parent=1 // pred_check_branch
      %303 = sbr.rel (0) target = $region45
    $region44: #{tpu_custom_call.1} parent=1 // pred_region
      %s305 = ssub.s32 384, 384
      %306 = vsyncadd [#allocation5], %s305
      %s307 = sshll.u32 [#allocation9], 4
      %s308 = int_to_ptr.vmem [resolvable:$true] %s307
      %313 = dma.vmem_to_hbm [thread:$0]  %s308, 384, %s5, [#allocation5], 128, 128, 8
    $region45: #{tpu_custom_call.1} parent=1 // pred_fallthru
      _
    // Predicated region
    $region46: #{tpu_custom_call.1} parent=1 // pred_check
      _
    $region47: #{tpu_custom_call.1} parent=1 // pred_check_branch
      %315 = sbr.rel (0) target = $region49
    $region48: #{tpu_custom_call.1} parent=1 // pred_region
      %316 = dma.done [#allocation5], 384
    $region49: #{tpu_custom_call.1} parent=1 // pred_fallthru
      _
    %317 = vsyncpa [#allocation4], 1
    %318 = vsyncpa [#allocation7], 1
    %319 = vsyncpa [#allocation5], 1

</llo_original>
